<compile_context>
chip_gen: v7x
topology: tpu7x:2x2x1
jax: 0.10.0
libtpu: 0.0.40
codegen_flags: <defaults>
</compile_context>

<pallas_src>
import functools
import math

import jax
import jax.numpy as jnp
from jax.experimental import pallas as pl
from jax.experimental.pallas import tpu as pltpu

LANE = 128
SUBLANE = 8
MAX_TILE_ROWS = 4096   # (4096,128) f32 tile = 2 MiB; 4 tiles x 2 bufs = 16 MiB VMEM
TARGET_BLOCKS = 4      # keep >= 4 grid blocks so v7x's two TCs both get work


def _round_up(a, b):
    return (a + b - 1) // b * b


def _spike_relu_acc_kernel(x_ref, v_ref, spk_ref, vout_ref, *, threshold, reset):
    """Timestep with accumulation: v = vmem + x, spike, reset."""
    v = v_ref[...] + x_ref[...]
    spike = v >= threshold
    spk_ref[...] = spike.astype(spk_ref.dtype)
    if reset == "to-zero":
        vout_ref[...] = jnp.where(spike, jnp.zeros_like(v), v)
    else:  # 'to-threshold' (default in the PyTorch module)
        vout_ref[...] = jnp.where(spike, v - threshold, v)


def _spike_relu_noacc_kernel(v_ref, spk_ref, vout_ref, *, threshold, reset):
    """Clamped timestep: x is never read; spikes come from vmem alone."""
    v = v_ref[...]
    spike = v >= threshold
    spk_ref[...] = spike.astype(spk_ref.dtype)
    if reset == "to-zero":
        vout_ref[...] = jnp.where(spike, jnp.zeros_like(v), v)
    else:
        vout_ref[...] = jnp.where(spike, v - threshold, v)


@functools.partial(
    jax.jit,
    static_argnames=("threshold", "accumulate", "reset", "spike_dtype"),
    donate_argnums=(1,))
def spike_relu_step(x, vmem2d, *, threshold, accumulate, reset, spike_dtype):
    """One SNN timestep.

    x       : activation in its original shape (only read when `accumulate`).
    vmem2d  : persistent membrane state, already in lane-dense (rows, 128) layout.
    Returns (spikes shaped like x, new vmem2d).  vmem2d is donated and aliased
    so the carried state is updated in place.
    """
    orig_shape = x.shape
    n = x.size
    rows, lane = vmem2d.shape
    assert lane == LANE and rows == pl.cdiv(n, LANE)

    itemsize = jnp.dtype(x.dtype).itemsize
    sdtype = jnp.dtype(spike_dtype) if spike_dtype is not None else jnp.dtype(x.dtype)
    # Sublane alignment must satisfy the most tightly packed dtype in play
    # (f32: 8 rows, bf16: 16, int8: 32).
    sub_align = SUBLANE * max(1, 4 // itemsize, 4 // sdtype.itemsize)

    # Large lane-dense tiles, but keep >= TARGET_BLOCKS blocks so the
    # "parallel" 1-D grid can be sharded across v7x's two TensorCores.  The
    # last block is ragged (masked by Pallas) instead of padding rows.
    if rows <= sub_align:
        tile_rows = rows  # single full-extent block (allowed regardless of tiling)
    else:
        tile_rows = min(
            MAX_TILE_ROWS,
            max(sub_align, _round_up(pl.cdiv(rows, TARGET_BLOCKS), sub_align)))
    grid = (pl.cdiv(rows, tile_rows),)

    tile_spec = pl.BlockSpec((tile_rows, LANE), lambda i: (i, 0))
    out_shape = (
        jax.ShapeDtypeStruct((rows, LANE), sdtype),    # spikes
        jax.ShapeDtypeStruct((rows, LANE), x.dtype),   # new vmem (aliased)
    )
    cparams = pltpu.CompilerParams(
        dimension_semantics=("parallel",),
        vmem_limit_bytes=32 * 1024 * 1024,
    )

    if accumulate:
        xf = x.reshape(-1)
        pad = rows * LANE - n
        if pad:  # < 128 elements, only when n % 128 != 0
            xf = jnp.pad(xf, (0, pad))
        x2d = xf.reshape(rows, LANE)
        cost = pl.CostEstimate(
            flops=2 * rows * LANE, transcendentals=0,
            bytes_accessed=rows * LANE * (3 * itemsize + sdtype.itemsize))
        kernel = functools.partial(
            _spike_relu_acc_kernel, threshold=float(threshold), reset=reset)
        spk2, vout2 = pl.pallas_call(
            kernel,
            out_shape=out_shape,
            grid=grid,
            in_specs=[tile_spec, tile_spec],     # x, vmem
            out_specs=(tile_spec, tile_spec),    # spikes, vmem
            input_output_aliases={1: 1},         # vmem updated in place
            compiler_params=cparams,
            cost_estimate=cost,
        )(x2d, vmem2d)
    else:
        # Clamped step: skip the x DMA entirely.
        cost = pl.CostEstimate(
            flops=2 * rows * LANE, transcendentals=0,
            bytes_accessed=rows * LANE * (2 * itemsize + sdtype.itemsize))
        kernel = functools.partial(
            _spike_relu_noacc_kernel, threshold=float(threshold), reset=reset)
        spk2, vout2 = pl.pallas_call(
            kernel,
            out_shape=out_shape,
            grid=grid,
            in_specs=[tile_spec],                # vmem only
            out_specs=(tile_spec, tile_spec),
            input_output_aliases={0: 1},
            compiler_params=cparams,
            cost_estimate=cost,
        )(vmem2d)

    spikes = spk2.reshape(-1)[:n].reshape(orig_shape)
    return spikes, vout2


class SpikeRelu:
    """Stateful wrapper mirroring the PyTorch spikeRelu module.

    The membrane potential is stored persistently in the flattened (rows, 128)
    layout; only the spikes output is reshaped back to the activation shape.
    """

    def __init__(self, v_th, layer_num=0, clp_slp=0, reset="to-threshold",
                 spike_dtype=None):
        self.threshold = float(v_th)
        self.layer_num = layer_num
        self.d = clp_slp
        self.clamp_time = layer_num * clp_slp
        self.reset = reset
        self.spike_dtype = spike_dtype
        self._vmem2d = None   # lazily initialized to zeros (PyTorch: vmem = 0 + x)
        self._shape = None

    def __call__(self, x):
        self.clamp_time -= 1
        if self._vmem2d is None:
            self._shape = x.shape
            rows = pl.cdiv(x.size, LANE)
            self._vmem2d = jnp.zeros((rows, LANE), x.dtype)
        accumulate = self.clamp_time <= 0  # host-side bool -> static kernel variant
        spikes, self._vmem2d = spike_relu_step(
            x, self._vmem2d,
            threshold=self.threshold, accumulate=accumulate,
            reset=self.reset, spike_dtype=self.spike_dtype)
        return spikes

    @property
    def vmem(self):
        if self._vmem2d is None:
            return 0
        n = math.prod(self._shape)
        return self._vmem2d.reshape(-1)[:n].reshape(self._shape)


def _reference_step(x, vmem, threshold, accumulate, reset):
    v = vmem + (x if accumulate else jnp.zeros_like(x))
    spikes = jnp.where(v >= threshold, 1.0, 0.0)
    if reset == "to-zero":
        v_new = jnp.where(v >= threshold, jnp.zeros_like(v), v)
    else:
        v_new = jnp.where(v >= threshold, v - threshold, v)
    return spikes, v_new


def _run_case(key, shape, v_th, layer_num, clp_slp, reset, spike_dtype, steps):
    layer = SpikeRelu(v_th, layer_num=layer_num, clp_slp=clp_slp,
                      reset=reset, spike_dtype=spike_dtype)
    ref_vmem = jnp.zeros(shape, jnp.float32)
    ref_clamp = layer_num * clp_slp
    ok = True
    for _ in range(steps):
        key, sub = jax.random.split(key)
        x = jax.random.normal(sub, shape, dtype=jnp.float32)
        spikes = jax.block_until_ready(layer(x))
        ref_clamp -= 1
        ref_spikes, ref_vmem = _reference_step(x, ref_vmem, v_th,
                                               ref_clamp <= 0, reset)
        ok &= bool(jnp.allclose(spikes.astype(jnp.float32), ref_spikes))
        ok &= bool(jnp.allclose(layer.vmem, ref_vmem, atol=1e-6))
    return key, ok


if __name__ == "__main__":
    key = jax.random.PRNGKey(0)
    ok = True

    # NCHW conv activations; layer_num=2, clp_slp=1 -> first step is clamped
    # (no-accumulate kernel), later steps accumulate: both specializations,
    # multi-block grid.
    key, o = _run_case(key, (2, 4, 16, 16), 0.5, 2, 1, "to-threshold", None, 3)
    ok &= o

    # Ragged shape: n % 128 != 0 and rows % tile_rows != 0 (masked last block),
    # zero-reset variant.
    key, o = _run_case(key, (2, 3, 20, 21), 0.25, 0, 0, "to-zero", None, 2)
    ok &= o

    # Narrow (int8) spike output option.
    key, o = _run_case(key, (2, 4, 16, 16), 0.5, 0, 0, "to-threshold", "int8", 2)
    ok &= o

    print("KERNEL_OK" if ok else "KERNEL_MISMATCH")
</pallas_src>

<mosaic_0001>
module attributes {stable_mosaic.version = 11 : i64} {
  func.func @_spike_relu_noacc_kernel(%arg0: i32, %arg1: memref<8x128xf32, #tpu.memory_space<vmem>>, %arg2: memref<8x128xf32, #tpu.memory_space<vmem>>, %arg3: memref<8x128xf32, #tpu.memory_space<vmem>>) attributes {dimension_semantics = [#tpu.dimension_semantics<parallel>], iteration_bounds = array<i64: 2>, scalar_prefetch = 0 : i64, scratch_operands = 0 : i64, tpu.core_type = #tpu.core_type<tc>, window_params = [{transform_indices = @transform_0, window_bounds = array<i64: 8, 128>}, {transform_indices = @transform_1, window_bounds = array<i64: 8, 128>}, {transform_indices = @transform_2, window_bounds = array<i64: 8, 128>}]} {
    %c0 = arith.constant 0 : index
    %c0_0 = arith.constant 0 : index
    %0 = vector.load %arg1[%c0, %c0_0] : memref<8x128xf32, #tpu.memory_space<vmem>>, vector<8x128xf32>
    %cst = arith.constant 5.000000e-01 : f32
    %1 = vector.broadcast %cst : f32 to vector<8x128xf32>
    %2 = arith.cmpf oge, %0, %1 : vector<8x128xf32>
    %3 = arith.extui %2 : vector<8x128xi1> to vector<8x128xi32>
    %4 = arith.sitofp %3 : vector<8x128xi32> to vector<8x128xf32>
    %c0_1 = arith.constant 0 : index
    %c0_2 = arith.constant 0 : index
    %5 = vector.load %arg2[%c0_1, %c0_2] : memref<8x128xf32, #tpu.memory_space<vmem>>, vector<8x128xf32>
    tpu.vector_store %arg2[%c0_1, %c0_2], %4 {strides = array<i32>} : memref<8x128xf32, #tpu.memory_space<vmem>>, vector<8x128xf32>,
    %cst_3 = arith.constant 5.000000e-01 : f32
    %6 = vector.broadcast %cst_3 : f32 to vector<8x128xf32>
    %7 = arith.subf %0, %6 : vector<8x128xf32>
    %8 = arith.select %2, %7, %0 : vector<8x128xi1>, vector<8x128xf32>
    %c0_4 = arith.constant 0 : index
    %c0_5 = arith.constant 0 : index
    %9 = vector.load %arg3[%c0_4, %c0_5] : memref<8x128xf32, #tpu.memory_space<vmem>>, vector<8x128xf32>
    tpu.vector_store %arg3[%c0_4, %c0_5], %8 {strides = array<i32>} : memref<8x128xf32, #tpu.memory_space<vmem>>, vector<8x128xf32>,
    return
  }
  func.func @transform_0(%arg0: i32) -> (i32, i32) {
    %c0_i32 = arith.constant 0 : i32
    %c0_i32_0 = arith.constant 0 : i32
    return %arg0, %c0_i32 : i32, i32
  }
  func.func @transform_1(%arg0: i32) -> (i32, i32) {
    %c0_i32 = arith.constant 0 : i32
    %c0_i32_0 = arith.constant 0 : i32
    return %arg0, %c0_i32 : i32, i32
  }
  func.func @transform_2(%arg0: i32) -> (i32, i32) {
    %c0_i32 = arith.constant 0 : i32
    %c0_i32_0 = arith.constant 0 : i32
    return %arg0, %c0_i32 : i32, i32
  }
}

</mosaic_0001>

<llo_original>
// kernel: spike_relu_step.1
$region0: #{spike_relu_step.1}
  #allocation0 [shape = 'u32[]', space=smem, size = 0x4, offset = 0x4, fixed_abs, tag = 'smem constant byte address 0x4 - core index']
  #allocation1 [shape = 'u32[144,128]{1,0:T(1,128)}', space=vmem, size = 0x12000, scoped, tag = 'internal scratch']
  %s0 = inlined_call_operand.hbm [shape: f32[16,128], index: 0, kind: input, shape index: {}, may-alias: {0,2}]
  %s1 = inlined_call_operand.vmem [shape: f32[16,128], index: 1, kind: output, shape index: {0}]
  %s2 = inlined_call_operand.hbm [shape: f32[16,128], index: 2, kind: output, shape index: {1}, may-alias: {0,2}]
  %3 = xla_tuple %s1, %s2
  %s4 = sld [smem:[#allocation0]]
  $region49: #{spike_relu_step.1} parent=0
    _
  %s6 = ssub.s32 1, %s4
  %s7 = scalar_select 0, %s6, %s4
  $region1: #{spike_relu_step.1} parent=0
    #allocation2 [shape = 'u8[8192]{0}', space=vmem, size = 0x2000, scoped, tag = 'input window, operand 0']
    #allocation3 [shape = 's32[2]{0}', space=sflag, size = 0x8, scoped, tag = 'scoped memory for spike_relu_step.1']
    #allocation4 [shape = 's32[2]{0}', space=sflag, size = 0x8, scoped, tag = 'scoped memory for spike_relu_step.1']
    #allocation5 [shape = 'u8[8192]{0}', space=vmem, size = 0x2000, scoped, tag = 'output window, operand 1']
    %8 = vsyncpa [#allocation3], 0
    %s9 = scalar_lea.sflag [#allocation3], 1
    %10 = vsyncpa %s9, 0
    %11 = vsyncpa [#allocation4], 0
    %s12 = scalar_lea.sflag [#allocation4], 1
    %13 = vsyncpa %s12, 0
    loop: start=0, step=1, limit=4
    $region2: #{spike_relu_step.1} parent=1 // loop_pre_header
      _
    $region3: #{spike_relu_step.1} parent=1 // loop_header
      %s15 = sphi 0, %s19
      %p16 = scmp.ge.s32.totalorder %s15, 4
      %s25 = sphi 0, %s27
      %s28 = sphi 0, %s25
      %s29 = sphi 0, %s28
      %s45 = sphi 0, %s29
      %s51 = sphi 0, %s53
      %s54 = sphi 0, %s51
      %s55 = sphi 0, %s54
      %s71 = sphi 0, %s55
      %s77 = sphi 0, %s79
      %s80 = sphi 0, %s77
      %s81 = sphi 0, %s80
      %s97 = sphi 0, %s81
    $region4: #{spike_relu_step.1} parent=1 // loop_header_branch
      %18 = sbr.rel (%p16) target = $region8
    $region5: #{spike_relu_step.1} parent=1 // loop_body
      %s20 = ssub.s32 %s15, 1
      %s21 = ssub.s32 %s15, 2
      %s22 = sadd.s32 %s15, 1
      %s23 = ssub.s32 %s15, %s22
      %p24 = scmp.eq.s32.totalorder %s23, 0
      %s26 = sadd.s32 %s25, 1
      %s27 = scalar_select %p24, %s25, %s26
      %p30 = pneg %p24
      %p31 = scmp.eq.s32.totalorder %s15, 1
      %p32 = por %p30, %p31
      %p33 = scmp.ne.s32.totalorder %s25, %s28
      %p34 = scmp.eq.s32.totalorder %s15, 0
      %p35 = por %p33, %p34
      %p36 = scmp.ne.s32.totalorder %s25, %s28
      %p37 = scmp.eq.s32.totalorder %s20, 1
      %p38 = por %p36, %p37
      %p39 = scmp.ne.s32.totalorder %s28, %s29
      %p40 = scmp.eq.s32.totalorder %s20, 0
      %p41 = por %p39, %p40
      %p42 = scmp.ne.s32.totalorder %s28, %s29
      %p43 = scmp.eq.s32.totalorder %s21, 1
      %p44 = por %p42, %p43
      %p46 = scmp.ne.s32.totalorder %s29, %s45
      %p47 = scmp.eq.s32.totalorder %s21, 0
      %p48 = por %p46, %p47
      %s49 = ssub.s32 %s15, %s22
      %p50 = scmp.eq.s32.totalorder %s49, 0
      %s52 = sadd.s32 %s51, 1
      %s53 = scalar_select %p50, %s51, %s52
      %p56 = pneg %p50
      %p57 = scmp.eq.s32.totalorder %s15, 1
      %p58 = por %p56, %p57
      %p59 = scmp.ne.s32.totalorder %s51, %s54
      %p60 = scmp.eq.s32.totalorder %s15, 0
      %p61 = por %p59, %p60
      %p62 = scmp.ne.s32.totalorder %s51, %s54
      %p63 = scmp.eq.s32.totalorder %s20, 1
      %p64 = por %p62, %p63
      %p65 = scmp.ne.s32.totalorder %s54, %s55
      %p66 = scmp.eq.s32.totalorder %s20, 0
      %p67 = por %p65, %p66
      %p68 = scmp.ne.s32.totalorder %s54, %s55
      %p69 = scmp.eq.s32.totalorder %s21, 1
      %p70 = por %p68, %p69
      %p72 = scmp.ne.s32.totalorder %s55, %s71
      %p73 = scmp.eq.s32.totalorder %s21, 0
      %p74 = por %p72, %p73
      %s75 = ssub.s32 %s15, %s22
      %p76 = scmp.eq.s32.totalorder %s75, 0
      %s78 = sadd.s32 %s77, 1
      %s79 = scalar_select %p76, %s77, %s78
      %p82 = pneg %p76
      %p83 = scmp.eq.s32.totalorder %s15, 1
      %p84 = por %p82, %p83
      %p85 = scmp.ne.s32.totalorder %s77, %s80
      %p86 = scmp.eq.s32.totalorder %s15, 0
      %p87 = por %p85, %p86
      %p88 = scmp.ne.s32.totalorder %s77, %s80
      %p89 = scmp.eq.s32.totalorder %s20, 1
      %p90 = por %p88, %p89
      %p91 = scmp.ne.s32.totalorder %s80, %s81
      %p92 = scmp.eq.s32.totalorder %s20, 0
      %p93 = por %p91, %p92
      %p94 = scmp.ne.s32.totalorder %s80, %s81
      %p95 = scmp.eq.s32.totalorder %s21, 1
      %p96 = por %p94, %p95
      %p98 = scmp.ne.s32.totalorder %s81, %s97
      %p99 = scmp.eq.s32.totalorder %s21, 0
      %p100 = por %p98, %p99
      %p101 = scmp.le.s32.totalorder 1, %s15
      %p102 = scmp.lt.s32.totalorder %s15, 3
      %p103 = pnand %p101, %p102
      %p104 = pneg %p103
      // Predicated region
      $region9: #{spike_relu_step.1} parent=5 // pred_check
        _
      $region10: #{spike_relu_step.1} parent=5 // pred_check_branch
        %106 = sbr.rel (%p103) target = $region12
      $region11: #{spike_relu_step.1} parent=5 // pred_region
        %s107 = ssub.s32 %s15, 1
      $region12: #{spike_relu_step.1} parent=5 // pred_fallthru
        _
      %p108 = scmp.lt.s32.totalorder %s15, 2
      // Predicated region
      $region13: #{spike_relu_step.1} parent=5 // pred_check
        %p109 = pneg %p108
      $region14: #{spike_relu_step.1} parent=5 // pred_check_branch
        %111 = sbr.rel (%p109) target = $region16
      $region15: #{spike_relu_step.1} parent=5 // pred_region
        // Predicated region
        $region17: #{spike_relu_step.1} parent=15 // pred_check
          %p112 = pneg %p35
        $region18: #{spike_relu_step.1} parent=15 // pred_check_branch
          %114 = sbr.rel (%p112) target = $region20
        $region19: #{spike_relu_step.1} parent=15 // pred_region
          %s115 = sand.u32 %s25, 1
          %s116 = scalar_lea.sflag [#allocation3], %s115
          %s117 = sand.u32 %s25, 1
          %s118 = smul.addr %s117, 8
          %s119 = scalar_lea.vmem [#allocation2], %s118
          %s121 = ssub.s32 128, 128
          %122 = vsyncadd %s116, %s121
          %s123 = smul.addr %s15, 128
          %s124 = scalar_lea.hbm %s0, %s123
          %s126 = sshll.u32 %s119, 4
          %s127 = int_to_ptr.vmem [resolvable:$true] %s126
          %129 = dma.hbm_to_vmem [thread:$0]  %s124, 128, %s127, %s116
        $region20: #{spike_relu_step.1} parent=15 // pred_fallthru
          _
      $region16: #{spike_relu_step.1} parent=5 // pred_fallthru
        _
      %p130 = scmp.le.s32.totalorder 1, %s15
      %p131 = scmp.lt.s32.totalorder %s15, 3
      %p132 = pnand %p130, %p131
      %p133 = pneg %p132
      // Predicated region
      $region21: #{spike_relu_step.1} parent=5 // pred_check
        _
      $region22: #{spike_relu_step.1} parent=5 // pred_check_branch
        %135 = sbr.rel (%p132) target = $region24
      $region23: #{spike_relu_step.1} parent=5 // pred_region
        %s136 = ssub.s32 %s15, 1
        %s137 = sand.u32 %s28, 1
        %s138 = scalar_lea.sflag [#allocation3], %s137
        %s139 = sand.u32 %s28, 1
        %s140 = smul.addr %s139, 8
        %s141 = scalar_lea.vmem [#allocation2], %s140
        // Predicated region
        $region25: #{spike_relu_step.1} parent=23 // pred_check
          %p142 = pneg %p41
        $region26: #{spike_relu_step.1} parent=23 // pred_check_branch
          %144 = sbr.rel (%p142) target = $region28
        $region27: #{spike_relu_step.1} parent=23 // pred_region
          %145 = dma.done %s138, 128
        $region28: #{spike_relu_step.1} parent=23 // pred_fallthru
          _
        %s146 = sand.u32 %s28, 1
        %s147 = scalar_lea.sflag [#allocation3], %s146
        %s148 = sand.u32 %s28, 1
        %s149 = smul.addr %s148, 8
        %s150 = scalar_lea.vmem [#allocation2], %s149
        %p151 = pneg %p41
        %p152 = pneg %p38
        %p153 = pneg %p67
        %p154 = pneg %p64
        %p155 = scmp.lt.s32.totalorder %s20, 1
        %s156 = scalar_select %p155, %s20, 1
        %s157 = smul.addr %s156, 8
        %s158 = scalar_lea.vmem %s1, %s157
        %p159 = pneg %p93
        %p160 = pneg %p90
        %s161 = sand.u32 %s80, 1
        %s162 = scalar_lea.sflag [#allocation4], %s161
        %s163 = sand.u32 %s80, 1
        %s164 = smul.addr %s163, 8
        %s165 = scalar_lea.vmem [#allocation5], %s164
        %p166 = scmp.lt.s32.totalorder %s20, 1
        %s167 = scalar_select %p166, %s20, 1
        %s168 = smul.addr %s167, 8
        %s169 = scalar_lea.vmem %s1, %s168
        %v170 = vld [vmem:[%s141] sm:$0xff]
        %vm171 = vcmp.ge.f32.partialorder %v170, 0.5
        %v172 = vsel %vm171, 1, 0
        %v173 = vcvt.s32.f32 %v172
        %174 = vst [vmem:[%s169] sm:$0xff] %v173
        %v175 = vsub.f32 %v170, 0.5
        %v176 = vsel %vm171, %v175, %v170
        %177 = vst [vmem:[%s165] sm:$0xff] %v176
        %p178 = scmp.lt.s32.totalorder %s20, 1
        %s179 = scalar_select %p178, %s20, 1
        %s180 = smul.addr %s179, 8
        %s181 = scalar_lea.vmem %s1, %s180
        %s182 = sand.u32 %s80, 1
        %s183 = scalar_lea.sflag [#allocation4], %s182
        %s184 = sand.u32 %s80, 1
        %s185 = smul.addr %s184, 8
        %s186 = scalar_lea.vmem [#allocation5], %s185
        // Predicated region
        $region29: #{spike_relu_step.1} parent=23 // pred_check
          %p187 = pneg %p64
        $region30: #{spike_relu_step.1} parent=23 // pred_check_branch
          %189 = sbr.rel (%p187) target = $region32
        $region31: #{spike_relu_step.1} parent=23 // pred_region
          _
        $region32: #{spike_relu_step.1} parent=23 // pred_fallthru
          _
        // Predicated region
        $region33: #{spike_relu_step.1} parent=23 // pred_check
          %p190 = pneg %p90
        $region34: #{spike_relu_step.1} parent=23 // pred_check_branch
          %192 = sbr.rel (%p190) target = $region36
        $region35: #{spike_relu_step.1} parent=23 // pred_region
          %s194 = ssub.s32 128, 128
          %195 = vsyncadd %s183, %s194
          %s196 = smul.addr %s20, 128
          %s197 = scalar_lea.hbm %s2, %s196
          %s199 = sshll.u32 %s186, 4
          %s200 = int_to_ptr.vmem [resolvable:$true] %s199
          %202 = dma.vmem_to_hbm [thread:$0]  %s200, 128, %s197, %s183
        $region36: #{spike_relu_step.1} parent=23 // pred_fallthru
          _
      $region24: #{spike_relu_step.1} parent=5 // pred_fallthru
        _
      %p203 = scmp.le.s32.totalorder 2, %s15
      // Predicated region
      $region37: #{spike_relu_step.1} parent=5 // pred_check
        %p204 = pneg %p203
      $region38: #{spike_relu_step.1} parent=5 // pred_check_branch
        %206 = sbr.rel (%p204) target = $region40
      $region39: #{spike_relu_step.1} parent=5 // pred_region
        %s207 = ssub.s32 %s15, 2
        // Predicated region
        $region41: #{spike_relu_step.1} parent=39 // pred_check
          %p208 = pneg %p70
        $region42: #{spike_relu_step.1} parent=39 // pred_check_branch
          %210 = sbr.rel (%p208) target = $region44
        $region43: #{spike_relu_step.1} parent=39 // pred_region
          %p211 = scmp.lt.s32.totalorder %s21, 1
          %s212 = scalar_select %p211, %s21, 1
          %s213 = smul.addr %s212, 8
          %s214 = scalar_lea.vmem %s1, %s213
        $region44: #{spike_relu_step.1} parent=39 // pred_fallthru
          _
        // Predicated region
        $region45: #{spike_relu_step.1} parent=39 // pred_check
          %p215 = pneg %p96
        $region46: #{spike_relu_step.1} parent=39 // pred_check_branch
          %217 = sbr.rel (%p215) target = $region48
        $region47: #{spike_relu_step.1} parent=39 // pred_region
          %s218 = sand.u32 %s81, 1
          %s219 = scalar_lea.sflag [#allocation4], %s218
          %s220 = sand.u32 %s81, 1
          %s221 = smul.addr %s220, 8
          %s222 = scalar_lea.vmem [#allocation5], %s221
          %223 = dma.done %s219, 128
        $region48: #{spike_relu_step.1} parent=39 // pred_fallthru
          _
      $region40: #{spike_relu_step.1} parent=5 // pred_fallthru
        _
    $region6: #{spike_relu_step.1} parent=1 // loop_footer
      %s19 = sadd.s32 1, %s15
    $region7: #{spike_relu_step.1} parent=1 // loop_footer_branch
      %14 = sbr.rel target = $region3
    $region8: #{spike_relu_step.1} parent=1 // loop_exit
      _
    %224 = vsyncpa [#allocation3], 1
    %s225 = scalar_lea.sflag [#allocation3], 1
    %226 = vsyncpa %s225, 1
    %227 = vsyncpa [#allocation4], 1
    %s228 = scalar_lea.sflag [#allocation4], 1
    %229 = vsyncpa %s228, 1

</llo_original>
